<compile_context>
chip_gen: v5e
topology: v5e:2x2
jax: 0.10.0
libtpu: 0.0.40
codegen_flags: <defaults>
</compile_context>

<pallas_src>
import functools

import jax
import jax.numpy as jnp
from jax.experimental import pallas as pl
from jax.experimental.pallas import tpu as pltpu

_BN_EPS = 1e-5
_PADL = 128   # left zero-halo width: multiple of 128 (lane-aligns the center tap) and >= W+1


def _round_up(x, m):
    return (x + m - 1) // m * m


def _bn_scale_shift(g, b, m, v, eps=_BN_EPS):
    """Fold eval-mode BatchNorm into a per-channel (scale, shift)."""
    s = g / jnp.sqrt(v + eps)
    return s, b - m * s


def _fold_params(params):
    """RepVGG re-parameterization (eval-mode BN): fold every branch of the depthwise 3x3
    block into one per-channel 3x3 kernel + bias, and every branch of the pointwise 1x1
    block into one (Cout, Cin) matrix + bias."""
    dw3_w = params["dw3_w"]                                   # (C, 1, 3, 3)
    cin = dw3_w.shape[0]
    cout = params["pw_w"].shape[0]

    s3, t3 = _bn_scale_shift(params["dw3_gamma"], params["dw3_beta"],
                             params["dw3_mean"], params["dw3_var"])
    s1, t1 = _bn_scale_shift(params["dw1_gamma"], params["dw1_beta"],
                             params["dw1_mean"], params["dw1_var"])
    sid, tid = _bn_scale_shift(params["dwid_gamma"], params["dwid_beta"],
                               params["dwid_mean"], params["dwid_var"])
    k = dw3_w[:, 0] * s3[:, None, None]                       # (C, 3, 3)
    k = k.at[:, 1, 1].add(params["dw1_w"] * s1 + sid)         # 1x1 branch + identity at center
    k_dw = k.reshape(cin, 9)                                  # tap order: dy*3 + dx
    b_dw = (t3 + t1 + tid).reshape(cin, 1)

    sp, tp = _bn_scale_shift(params["pw_gamma"], params["pw_beta"],
                             params["pw_mean"], params["pw_var"])
    w_pw = params["pw_w"] * sp[:, None]                       # (Cout, Cin)
    b_pw = tp
    if cout == cin:                                           # identity branch of the 1x1 block
        s2, t2 = _bn_scale_shift(params["pwid_gamma"], params["pwid_beta"],
                                 params["pwid_mean"], params["pwid_var"])
        w_pw = w_pw + jnp.diag(s2)
        b_pw = b_pw + t2
    return k_dw, b_dw, w_pw, b_pw.reshape(cout, 1)


def _sep_repvgg_kernel(x_ref, kdw_ref, bdw_ref, cm_ref, wpw_ref, bpw_ref, o_ref,
                       *, width, padl):
    """Fused depthwise-3x3 + pointwise-1x1 RepVGG block for one block of Nb images.

    x_ref:   (Nb, C, Ltot)     zero-haloed, lane-aligned flattened NCHW images
    kdw_ref: (C, 9)            folded depthwise 3x3 taps (tap order dy*3 + dx)
    bdw_ref: (C, 1)            folded depthwise bias
    cm_ref:  (2, HWp)          column-edge validity masks (row 0: left, row 1: right)
    wpw_ref: (Cout, C) bf16    folded pointwise weight
    bpw_ref: (Cout, 1) f32     folded pointwise bias
    o_ref:   (Nb, Cout, HWp)
    """
    nb = x_ref.shape[0]
    hwp = o_ref.shape[2]
    cm_l = cm_ref[0:1]                                         # (1, HWp) sublane broadcast
    cm_r = cm_ref[1:2]

    for b in range(nb):                                        # static unroll over the block
        # Depthwise RepVGG: 9 shifted-slice per-channel FMAs grouped by dx so each edge mask
        # is applied exactly once (2 mask vmuls total), then bias + ReLU.  All math in f32
        # (no bf16 VALU on v5e).
        acc_l = acc_c = acc_r = None
        for dy in range(3):
            base = padl + (dy - 1) * width
            tl = x_ref[b, :, base - 1:base - 1 + hwp] * kdw_ref[:, 3 * dy + 0:3 * dy + 1]
            tc = x_ref[b, :, base:base + hwp] * kdw_ref[:, 3 * dy + 1:3 * dy + 2]
            tr = x_ref[b, :, base + 1:base + 1 + hwp] * kdw_ref[:, 3 * dy + 2:3 * dy + 3]
            acc_l = tl if acc_l is None else acc_l + tl
            acc_c = tc if acc_c is None else acc_c + tc
            acc_r = tr if acc_r is None else acc_r + tr
        y1 = jnp.maximum(acc_c + cm_l * acc_l + cm_r * acc_r + bdw_ref[...], 0.0)

        # Pointwise RepVGG1x1: lane-dense bf16 MXU matmul (f32 accumulate) + bias + ReLU.
        y2 = jnp.dot(wpw_ref[...], y1.astype(jnp.bfloat16),
                     preferred_element_type=jnp.float32) + bpw_ref[...]
        o_ref[b] = jnp.maximum(y2, 0.0).astype(o_ref.dtype)


@jax.jit
def separable_repvgg_block(x, params):
    """x: (N, Cin, H, W) float32 NCHW.  Returns (N, Cout, H, W) float32."""
    N, C, H, W = x.shape
    cout = params["pw_w"].shape[0]
    hw = H * W
    hw_pad = _round_up(hw, 128)                 # lane-dense output width
    l_int = _round_up(hw_pad + W + 1, 128)      # interior + right halo (covers row over-runs)
    l_tot = _PADL + l_int                       # total padded width (multiple of 128)

    k_dw, b_dw, w_pw, b_pw = _fold_params(params)
    w_pw_bf16 = w_pw.astype(jnp.bfloat16)       # one-time cast; MXU matmul runs in bf16

    # NCHW-native: merge spatial onto the lane axis (free reshape), then ONE pad pass that
    # (a) zero-halos the rows so the 9 taps are plain shifted slices (no in-kernel staging
    # copy / zero-frame writes / scratch), (b) 128-aligns the center tap, and (c) makes the
    # output width a lane-dense multiple of 128.
    x_flat = x.reshape(N, C, hw)
    x_padded = jnp.pad(x_flat, ((0, 0), (0, 0), (_PADL, l_int - hw)))

    # Column-edge validity masks for the dx=-1 / dx=+1 tap groups (tiny; lanes >= hw unused).
    jj = jnp.arange(hw_pad, dtype=jnp.int32) % W
    cmask = jnp.stack([(jj >= 1), (jj <= W - 2)]).astype(x.dtype)      # (2, hw_pad)

    # Batch blocking: biggest block such that double-buffered in+out tiles stay within a
    # ~16 MiB budget (fits v7x's 64 MiB VMEM with headroom), Nb divides N (no ragged block),
    # and the grid keeps >= 2 "parallel" steps when N >= 2 (v7x has 2 TensorCores).
    per_img_bytes = 4 * (C * l_tot + cout * hw_pad)
    nb_cap = max(1, (8 * 1024 * 1024) // per_img_bytes)
    if N >= 2:
        nb_cap = min(nb_cap, N // 2)
    nb = max(d for d in range(1, min(nb_cap, N) + 1) if N % d == 0)
    grid = (N // nb,)

    # VMEM limit derived from the actual tiles (raise above the 32 MiB default only when the
    # double-buffered tiles need it; v6e has headroom to 128 MiB, v7x tiles are kept small).
    tile_bytes = nb * per_img_bytes
    vmem_limit = int(min(96 * 1024 * 1024, max(32 * 1024 * 1024, 4 * tile_bytes + (2 << 20))))

    kernel = functools.partial(_sep_repvgg_kernel, width=W, padl=_PADL)
    out = pl.pallas_call(
        kernel,
        out_shape=jax.ShapeDtypeStruct((N, cout, hw_pad), x.dtype),
        grid=grid,
        in_specs=[
            pl.BlockSpec((nb, C, l_tot), lambda i: (i, 0, 0)),
            pl.BlockSpec((C, 9), lambda i: (0, 0)),
            pl.BlockSpec((C, 1), lambda i: (0, 0)),
            pl.BlockSpec((2, hw_pad), lambda i: (0, 0)),
            pl.BlockSpec((cout, C), lambda i: (0, 0)),
            pl.BlockSpec((cout, 1), lambda i: (0, 0)),
        ],
        out_specs=pl.BlockSpec((nb, cout, hw_pad), lambda i: (i, 0, 0)),
        compiler_params=pltpu.CompilerParams(
            dimension_semantics=("parallel",),
            vmem_limit_bytes=vmem_limit),
    )(x_padded, k_dw, b_dw, cmask, w_pw_bf16, b_pw)

    # Crop the lane padding (no-op when H*W is already a multiple of 128) and restore NCHW.
    return out[:, :, :hw].reshape(N, cout, H, W)


def _reference(x, params):
    """Pure-JAX reference mirroring the PyTorch forward (deploy=False, eval-mode BN),
    written with elementwise f32 ops only (no XLA dot/conv precision ambiguity)."""
    N, C, H, W = x.shape
    cout = params["pw_w"].shape[0]

    def bn(y, pre):
        shp = (1, -1, 1, 1)
        g = params[pre + "_gamma"].reshape(shp)
        b = params[pre + "_beta"].reshape(shp)
        m = params[pre + "_mean"].reshape(shp)
        v = params[pre + "_var"].reshape(shp)
        return (y - m) / jnp.sqrt(v + _BN_EPS) * g + b

    # depthwise RepVGGBlock: 3x3 dw conv+BN + 1x1 dw conv+BN + identity BN, ReLU
    xp = jnp.pad(x, ((0, 0), (0, 0), (1, 1), (1, 1)))
    w3 = params["dw3_w"][:, 0]                                 # (C, 3, 3)
    dense = jnp.zeros_like(x)
    for dy in range(3):
        for dx in range(3):
            dense = dense + xp[:, :, dy:dy + H, dx:dx + W] * w3[:, dy, dx].reshape(1, C, 1, 1)
    dense = bn(dense, "dw3")
    one = bn(x * params["dw1_w"].reshape(1, C, 1, 1), "dw1")
    ident = bn(x, "dwid")
    y1 = jnp.maximum(dense + one + ident, 0.0)

    # pointwise RepVGGBlock1x1: 1x1 conv+BN (+ identity BN if Cout == Cin), ReLU
    pw = jnp.sum(params["pw_w"][None, :, :, None, None] * y1[:, None, :, :, :], axis=2)
    pw = bn(pw, "pw")
    if cout == C:
        pw = pw + bn(y1, "pwid")
    return jnp.maximum(pw, 0.0)


def init_params(key, in_channels, out_channels):
    keys = list(jax.random.split(key, 32))

    def nk():
        return keys.pop()

    def add_bn(prefix, n, p):
        p[prefix + "_gamma"] = 1.0 + 0.1 * jax.random.normal(nk(), (n,), jnp.float32)
        p[prefix + "_beta"] = 0.1 * jax.random.normal(nk(), (n,), jnp.float32)
        p[prefix + "_mean"] = 0.1 * jax.random.normal(nk(), (n,), jnp.float32)
        p[prefix + "_var"] = jnp.abs(1.0 + 0.1 * jax.random.normal(nk(), (n,), jnp.float32))

    p = {}
    # depthwise RepVGGBlock(in, in, k=3, stride=1, pad=1, groups=in)
    p["dw3_w"] = 0.1 * jax.random.normal(nk(), (in_channels, 1, 3, 3), jnp.float32)
    add_bn("dw3", in_channels, p)
    p["dw1_w"] = 0.1 * jax.random.normal(nk(), (in_channels,), jnp.float32)   # (C,1,1,1) squeezed
    add_bn("dw1", in_channels, p)
    add_bn("dwid", in_channels, p)                              # rbr_identity (stride == 1)
    # pointwise RepVGGBlock1x1(in, out)
    p["pw_w"] = 0.1 * jax.random.normal(nk(), (out_channels, in_channels), jnp.float32)
    add_bn("pw", out_channels, p)
    if out_channels == in_channels:
        add_bn("pwid", in_channels, p)                          # rbr_identity of the 1x1 block
    return p


if __name__ == "__main__":
    key = jax.random.PRNGKey(0)
    kx, kp = jax.random.split(key)

    N, C, H, W = 2, 4, 16, 16        # in_channels == out_channels -> both identity branches active
    x = jax.random.normal(kx, (N, C, H, W), jnp.float32)
    params = init_params(kp, in_channels=C, out_channels=C)

    out = jax.block_until_ready(separable_repvgg_block(x, params))
    ref = _reference(x, params)

    assert out.shape == ref.shape == (N, C, H, W)
    # Tolerance intentionally covers the bf16 MXU path of the pointwise matmul (<~1e-2 abs);
    # any structural bug (taps / edge masks / BN folding) produces O(0.1..1) errors.
    err = jnp.max(jnp.abs(out - ref))
    assert jnp.allclose(out, ref, atol=2e-2, rtol=2e-2), (
        "mismatch vs reference: max abs err = %s" % err)

    print("KERNEL_OK")
</pallas_src>

<mosaic_0001>
module attributes {stable_mosaic.version = 11 : i64} {
  func.func @_sep_repvgg_kernel(%arg0: i32, %arg1: memref<1x4x512xf32, #tpu.memory_space<vmem>>, %arg2: memref<4x9xf32, #tpu.memory_space<vmem>>, %arg3: memref<4x1xf32, #tpu.memory_space<vmem>>, %arg4: memref<2x256xf32, #tpu.memory_space<vmem>>, %arg5: memref<4x4xbf16, #tpu.memory_space<vmem>>, %arg6: memref<4x1xf32, #tpu.memory_space<vmem>>, %arg7: memref<1x4x256xf32, #tpu.memory_space<vmem>>) attributes {dimension_semantics = [#tpu.dimension_semantics<parallel>], iteration_bounds = array<i64: 2>, scalar_prefetch = 0 : i64, scratch_operands = 0 : i64, tpu.core_type = #tpu.core_type<tc>, window_params = [{transform_indices = @transform_0, window_bounds = array<i64: 1, 4, 512>}, {pipeline_mode = #tpu.pipeline_mode<synchronous>, transform_indices = @transform_1, window_bounds = array<i64: 4, 9>}, {pipeline_mode = #tpu.pipeline_mode<synchronous>, transform_indices = @transform_2, window_bounds = array<i64: 4, 1>}, {pipeline_mode = #tpu.pipeline_mode<synchronous>, transform_indices = @transform_3, window_bounds = array<i64: 2, 256>}, {pipeline_mode = #tpu.pipeline_mode<synchronous>, transform_indices = @transform_4, window_bounds = array<i64: 4, 4>}, {pipeline_mode = #tpu.pipeline_mode<synchronous>, transform_indices = @transform_5, window_bounds = array<i64: 4, 1>}, {transform_indices = @transform_6, window_bounds = array<i64: 1, 4, 256>}]} {
    %c0 = arith.constant 0 : index
    %c0_0 = arith.constant 0 : index
    %0 = vector.load %arg4[%c0, %c0_0] : memref<2x256xf32, #tpu.memory_space<vmem>>, vector<1x256xf32>
    %c1 = arith.constant 1 : index
    %c0_1 = arith.constant 0 : index
    %1 = vector.load %arg4[%c1, %c0_1] : memref<2x256xf32, #tpu.memory_space<vmem>>, vector<1x256xf32>
    %c0_2 = arith.constant 0 : index
    %c0_3 = arith.constant 0 : index
    %c111 = arith.constant 111 : index
    %2 = vector.load %arg1[%c0_2, %c0_3, %c111] : memref<1x4x512xf32, #tpu.memory_space<vmem>>, vector<1x4x256xf32>
    %3 = vector.shape_cast %2 : vector<1x4x256xf32> to vector<4x256xf32>
    %c0_4 = arith.constant 0 : index
    %c0_5 = arith.constant 0 : index
    %4 = vector.load %arg2[%c0_4, %c0_5] : memref<4x9xf32, #tpu.memory_space<vmem>>, vector<4x1xf32>
    %5 = vector.broadcast %4 : vector<4x1xf32> to vector<4x256xf32>
    %6 = arith.mulf %3, %5 : vector<4x256xf32>
    %c0_6 = arith.constant 0 : index
    %c0_7 = arith.constant 0 : index
    %c112 = arith.constant 112 : index
    %7 = vector.load %arg1[%c0_6, %c0_7, %c112] : memref<1x4x512xf32, #tpu.memory_space<vmem>>, vector<1x4x256xf32>
    %8 = vector.shape_cast %7 : vector<1x4x256xf32> to vector<4x256xf32>
    %c0_8 = arith.constant 0 : index
    %c1_9 = arith.constant 1 : index
    %9 = vector.load %arg2[%c0_8, %c1_9] : memref<4x9xf32, #tpu.memory_space<vmem>>, vector<4x1xf32>
    %10 = vector.broadcast %9 : vector<4x1xf32> to vector<4x256xf32>
    %11 = arith.mulf %8, %10 : vector<4x256xf32>
    %c0_10 = arith.constant 0 : index
    %c0_11 = arith.constant 0 : index
    %c113 = arith.constant 113 : index
    %12 = vector.load %arg1[%c0_10, %c0_11, %c113] : memref<1x4x512xf32, #tpu.memory_space<vmem>>, vector<1x4x256xf32>
    %13 = vector.shape_cast %12 : vector<1x4x256xf32> to vector<4x256xf32>
    %c0_12 = arith.constant 0 : index
    %c2 = arith.constant 2 : index
    %14 = vector.load %arg2[%c0_12, %c2] : memref<4x9xf32, #tpu.memory_space<vmem>>, vector<4x1xf32>
    %15 = vector.broadcast %14 : vector<4x1xf32> to vector<4x256xf32>
    %16 = arith.mulf %13, %15 : vector<4x256xf32>
    %c0_13 = arith.constant 0 : index
    %c0_14 = arith.constant 0 : index
    %c127 = arith.constant 127 : index
    %17 = vector.load %arg1[%c0_13, %c0_14, %c127] : memref<1x4x512xf32, #tpu.memory_space<vmem>>, vector<1x4x256xf32>
    %18 = vector.shape_cast %17 : vector<1x4x256xf32> to vector<4x256xf32>
    %c0_15 = arith.constant 0 : index
    %c3 = arith.constant 3 : index
    %19 = vector.load %arg2[%c0_15, %c3] : memref<4x9xf32, #tpu.memory_space<vmem>>, vector<4x1xf32>
    %20 = vector.broadcast %19 : vector<4x1xf32> to vector<4x256xf32>
    %21 = arith.mulf %18, %20 : vector<4x256xf32>
    %c0_16 = arith.constant 0 : index
    %c0_17 = arith.constant 0 : index
    %c128 = arith.constant 128 : index
    %22 = vector.load %arg1[%c0_16, %c0_17, %c128] : memref<1x4x512xf32, #tpu.memory_space<vmem>>, vector<1x4x256xf32>
    %23 = vector.shape_cast %22 : vector<1x4x256xf32> to vector<4x256xf32>
    %c0_18 = arith.constant 0 : index
    %c4 = arith.constant 4 : index
    %24 = vector.load %arg2[%c0_18, %c4] : memref<4x9xf32, #tpu.memory_space<vmem>>, vector<4x1xf32>
    %25 = vector.broadcast %24 : vector<4x1xf32> to vector<4x256xf32>
    %26 = arith.mulf %23, %25 : vector<4x256xf32>
    %c0_19 = arith.constant 0 : index
    %c0_20 = arith.constant 0 : index
    %c129 = arith.constant 129 : index
    %27 = vector.load %arg1[%c0_19, %c0_20, %c129] : memref<1x4x512xf32, #tpu.memory_space<vmem>>, vector<1x4x256xf32>
    %28 = vector.shape_cast %27 : vector<1x4x256xf32> to vector<4x256xf32>
    %c0_21 = arith.constant 0 : index
    %c5 = arith.constant 5 : index
    %29 = vector.load %arg2[%c0_21, %c5] : memref<4x9xf32, #tpu.memory_space<vmem>>, vector<4x1xf32>
    %30 = vector.broadcast %29 : vector<4x1xf32> to vector<4x256xf32>
    %31 = arith.mulf %28, %30 : vector<4x256xf32>
    %32 = arith.addf %6, %21 : vector<4x256xf32>
    %33 = arith.addf %11, %26 : vector<4x256xf32>
    %34 = arith.addf %16, %31 : vector<4x256xf32>
    %c0_22 = arith.constant 0 : index
    %c0_23 = arith.constant 0 : index
    %c143 = arith.constant 143 : index
    %35 = vector.load %arg1[%c0_22, %c0_23, %c143] : memref<1x4x512xf32, #tpu.memory_space<vmem>>, vector<1x4x256xf32>
    %36 = vector.shape_cast %35 : vector<1x4x256xf32> to vector<4x256xf32>
    %c0_24 = arith.constant 0 : index
    %c6 = arith.constant 6 : index
    %37 = vector.load %arg2[%c0_24, %c6] : memref<4x9xf32, #tpu.memory_space<vmem>>, vector<4x1xf32>
    %38 = vector.broadcast %37 : vector<4x1xf32> to vector<4x256xf32>
    %39 = arith.mulf %36, %38 : vector<4x256xf32>
    %c0_25 = arith.constant 0 : index
    %c0_26 = arith.constant 0 : index
    %c144 = arith.constant 144 : index
    %40 = vector.load %arg1[%c0_25, %c0_26, %c144] : memref<1x4x512xf32, #tpu.memory_space<vmem>>, vector<1x4x256xf32>
    %41 = vector.shape_cast %40 : vector<1x4x256xf32> to vector<4x256xf32>
    %c0_27 = arith.constant 0 : index
    %c7 = arith.constant 7 : index
    %42 = vector.load %arg2[%c0_27, %c7] : memref<4x9xf32, #tpu.memory_space<vmem>>, vector<4x1xf32>
    %43 = vector.broadcast %42 : vector<4x1xf32> to vector<4x256xf32>
    %44 = arith.mulf %41, %43 : vector<4x256xf32>
    %c0_28 = arith.constant 0 : index
    %c0_29 = arith.constant 0 : index
    %c145 = arith.constant 145 : index
    %45 = vector.load %arg1[%c0_28, %c0_29, %c145] : memref<1x4x512xf32, #tpu.memory_space<vmem>>, vector<1x4x256xf32>
    %46 = vector.shape_cast %45 : vector<1x4x256xf32> to vector<4x256xf32>
    %c0_30 = arith.constant 0 : index
    %c8 = arith.constant 8 : index
    %47 = vector.load %arg2[%c0_30, %c8] : memref<4x9xf32, #tpu.memory_space<vmem>>, vector<4x1xf32>
    %48 = vector.broadcast %47 : vector<4x1xf32> to vector<4x256xf32>
    %49 = arith.mulf %46, %48 : vector<4x256xf32>
    %50 = arith.addf %32, %39 : vector<4x256xf32>
    %51 = arith.addf %33, %44 : vector<4x256xf32>
    %52 = arith.addf %34, %49 : vector<4x256xf32>
    %53 = vector.broadcast %0 : vector<1x256xf32> to vector<4x256xf32>
    %54 = arith.mulf %53, %50 : vector<4x256xf32>
    %55 = arith.addf %51, %54 : vector<4x256xf32>
    %56 = vector.broadcast %1 : vector<1x256xf32> to vector<4x256xf32>
    %57 = arith.mulf %56, %52 : vector<4x256xf32>
    %58 = arith.addf %55, %57 : vector<4x256xf32>
    %c0_31 = arith.constant 0 : index
    %c0_32 = arith.constant 0 : index
    %59 = vector.load %arg3[%c0_31, %c0_32] : memref<4x1xf32, #tpu.memory_space<vmem>>, vector<4x1xf32>
    %60 = vector.broadcast %59 : vector<4x1xf32> to vector<4x256xf32>
    %61 = arith.addf %58, %60 : vector<4x256xf32>
    %cst = arith.constant 0.000000e+00 : f32
    %62 = vector.broadcast %cst : f32 to vector<4x256xf32>
    %63 = arith.maximumf %61, %62 : vector<4x256xf32>
    %c0_33 = arith.constant 0 : index
    %c0_34 = arith.constant 0 : index
    %64 = vector.load %arg5[%c0_33, %c0_34] : memref<4x4xbf16, #tpu.memory_space<vmem>>, vector<4x4xbf16>
    %65 = arith.truncf %63 : vector<4x256xf32> to vector<4x256xbf16>
    %cst_35 = arith.constant dense<0.000000e+00> : vector<4x256xf32>
    %66 = tpu.matmul %64, %65, %cst_35 {dimension_numbers = #tpu.dot_dimension_numbers<[1], [0], [0], [1], [0, 0, 1, 1], [], []>} : vector<4x4xbf16>, vector<4x256xbf16>, vector<4x256xf32> -> vector<4x256xf32>
    %c0_36 = arith.constant 0 : index
    %c0_37 = arith.constant 0 : index
    %67 = vector.load %arg6[%c0_36, %c0_37] : memref<4x1xf32, #tpu.memory_space<vmem>>, vector<4x1xf32>
    %68 = vector.broadcast %67 : vector<4x1xf32> to vector<4x256xf32>
    %69 = arith.addf %66, %68 : vector<4x256xf32>
    %cst_38 = arith.constant 0.000000e+00 : f32
    %70 = vector.broadcast %cst_38 : f32 to vector<4x256xf32>
    %71 = arith.maximumf %69, %70 : vector<4x256xf32>
    %c0_39 = arith.constant 0 : index
    %c0_40 = arith.constant 0 : index
    %c0_41 = arith.constant 0 : index
    %72 = vector.load %arg7[%c0_39, %c0_40, %c0_41] : memref<1x4x256xf32, #tpu.memory_space<vmem>>, vector<1x4x256xf32>
    %73 = vector.shape_cast %72 : vector<1x4x256xf32> to vector<4x256xf32>
    %74 = vector.shape_cast %71 : vector<4x256xf32> to vector<1x4x256xf32>
    tpu.vector_store %arg7[%c0_39, %c0_40, %c0_41], %74 {strides = array<i32>} : memref<1x4x256xf32, #tpu.memory_space<vmem>>, vector<1x4x256xf32>,
    return
  }
  func.func @transform_0(%arg0: i32) -> (i32, i32, i32) {
    %c0_i32 = arith.constant 0 : i32
    %c0_i32_0 = arith.constant 0 : i32
    %c0_i32_1 = arith.constant 0 : i32
    return %arg0, %c0_i32, %c0_i32_0 : i32, i32, i32
  }
  func.func @transform_1(%arg0: i32) -> (i32, i32) {
    %c0_i32 = arith.constant 0 : i32
    %c0_i32_0 = arith.constant 0 : i32
    %c0_i32_1 = arith.constant 0 : i32
    return %c0_i32, %c0_i32_0 : i32, i32
  }
  func.func @transform_2(%arg0: i32) -> (i32, i32) {
    %c0_i32 = arith.constant 0 : i32
    %c0_i32_0 = arith.constant 0 : i32
    %c0_i32_1 = arith.constant 0 : i32
    return %c0_i32, %c0_i32_0 : i32, i32
  }
  func.func @transform_3(%arg0: i32) -> (i32, i32) {
    %c0_i32 = arith.constant 0 : i32
    %c0_i32_0 = arith.constant 0 : i32
    %c0_i32_1 = arith.constant 0 : i32
    return %c0_i32, %c0_i32_0 : i32, i32
  }
  func.func @transform_4(%arg0: i32) -> (i32, i32) {
    %c0_i32 = arith.constant 0 : i32
    %c0_i32_0 = arith.constant 0 : i32
    %c0_i32_1 = arith.constant 0 : i32
    return %c0_i32, %c0_i32_0 : i32, i32
  }
  func.func @transform_5(%arg0: i32) -> (i32, i32) {
    %c0_i32 = arith.constant 0 : i32
    %c0_i32_0 = arith.constant 0 : i32
    %c0_i32_1 = arith.constant 0 : i32
    return %c0_i32, %c0_i32_0 : i32, i32
  }
  func.func @transform_6(%arg0: i32) -> (i32, i32, i32) {
    %c0_i32 = arith.constant 0 : i32
    %c0_i32_0 = arith.constant 0 : i32
    %c0_i32_1 = arith.constant 0 : i32
    return %arg0, %c0_i32, %c0_i32_0 : i32, i32, i32
  }
}

</mosaic_0001>

<llo_original>
// kernel: separable_repvgg_block.1
$region0: #{separable_repvgg_block.1}
  #allocation0 [shape = 'u32[]', space=smem, size = 0x4, offset = 0x4, fixed_abs, tag = 'smem constant byte address 0x4 - core index']
  #allocation1 [shape = 'u32[72,128]{1,0:T(1,128)}', space=vmem, size = 0x9000, scoped, tag = 'internal scratch']
  %s0 = inlined_call_operand.vmem [shape: f32[2,4,512], index: 0, kind: input, shape index: {}]
  %s1 = inlined_call_operand.vmem [shape: f32[4,9], index: 1, kind: input, shape index: {}]
  %s2 = inlined_call_operand.vmem [shape: f32[4,1], index: 2, kind: input, shape index: {}]
  %s3 = inlined_call_operand.vmem [shape: f32[2,256], index: 3, kind: input, shape index: {}]
  %s4 = inlined_call_operand.vmem [shape: bf16[4,4], index: 4, kind: input, shape index: {}]
  %s5 = inlined_call_operand.vmem [shape: f32[4,1], index: 5, kind: input, shape index: {}]
  %s6 = inlined_call_operand.vmem [shape: f32[2,4,256], index: 6, kind: output, shape index: {}]
  %s7 = sld [smem:[#allocation0]]
  $region57: #{separable_repvgg_block.1} parent=0
    _
  %s9 = ssub.s32 1, %s7
  %s10 = scalar_select 0, %s9, %s7
  loop: start=0, step=1, limit=4
  $region2: #{separable_repvgg_block.1} parent=0 // loop_pre_header
    _
  $region3: #{separable_repvgg_block.1} parent=0 // loop_header
    %s12 = sphi 0, %s16
    %p13 = scmp.ge.s32.totalorder %s12, 4
    %s22 = sphi 0, %s24
    %s25 = sphi 0, %s22
    %s26 = sphi 0, %s25
    %s42 = sphi 0, %s26
    %s46 = sphi 0, %s46
    %s48 = sphi 0, %s46
    %s49 = sphi 0, %s48
    %s63 = sphi 0, %s49
    %s67 = sphi 0, %s67
    %s69 = sphi 0, %s67
    %s70 = sphi 0, %s69
    %s84 = sphi 0, %s70
    %s88 = sphi 0, %s88
    %s90 = sphi 0, %s88
    %s91 = sphi 0, %s90
    %s105 = sphi 0, %s91
    %s109 = sphi 0, %s109
    %s111 = sphi 0, %s109
    %s112 = sphi 0, %s111
    %s126 = sphi 0, %s112
    %s130 = sphi 0, %s130
    %s132 = sphi 0, %s130
    %s133 = sphi 0, %s132
    %s147 = sphi 0, %s133
    %s153 = sphi 0, %s155
    %s156 = sphi 0, %s153
    %s157 = sphi 0, %s156
    %s173 = sphi 0, %s157
  $region4: #{separable_repvgg_block.1} parent=0 // loop_header_branch
    %15 = sbr.rel (%p13) target = $region8
  $region5: #{separable_repvgg_block.1} parent=0 // loop_body
    %s17 = ssub.s32 %s12, 1
    %s18 = ssub.s32 %s12, 2
    %s19 = sadd.s32 %s12, 1
    %s20 = ssub.s32 %s12, %s19
    %p21 = scmp.eq.s32.totalorder %s20, 0
    %s23 = sadd.s32 %s22, 1
    %s24 = scalar_select %p21, %s22, %s23
    %p27 = pneg %p21
    %p28 = scmp.eq.s32.totalorder %s12, 1
    %p29 = por %p27, %p28
    %p30 = scmp.ne.s32.totalorder %s22, %s25
    %p31 = scmp.eq.s32.totalorder %s12, 0
    %p32 = por %p30, %p31
    %p33 = scmp.ne.s32.totalorder %s22, %s25
    %p34 = scmp.eq.s32.totalorder %s17, 1
    %p35 = por %p33, %p34
    %p36 = scmp.ne.s32.totalorder %s25, %s26
    %p37 = scmp.eq.s32.totalorder %s17, 0
    %p38 = por %p36, %p37
    %p39 = scmp.ne.s32.totalorder %s25, %s26
    %p40 = scmp.eq.s32.totalorder %s18, 1
    %p41 = por %p39, %p40
    %p43 = scmp.ne.s32.totalorder %s26, %s42
    %p44 = scmp.eq.s32.totalorder %s18, 0
    %p45 = por %p43, %p44
    %s47 = sadd.s32 %s46, 1
    %p50 = scmp.eq.s32.totalorder %s12, 1
    %p51 = scmp.ne.s32.totalorder %s46, %s48
    %p52 = scmp.eq.s32.totalorder %s12, 0
    %p53 = por %p51, %p52
    %p54 = scmp.ne.s32.totalorder %s46, %s48
    %p55 = scmp.eq.s32.totalorder %s17, 1
    %p56 = por %p54, %p55
    %p57 = scmp.ne.s32.totalorder %s48, %s49
    %p58 = scmp.eq.s32.totalorder %s17, 0
    %p59 = por %p57, %p58
    %p60 = scmp.ne.s32.totalorder %s48, %s49
    %p61 = scmp.eq.s32.totalorder %s18, 1
    %p62 = por %p60, %p61
    %p64 = scmp.ne.s32.totalorder %s49, %s63
    %p65 = scmp.eq.s32.totalorder %s18, 0
    %p66 = por %p64, %p65
    %s68 = sadd.s32 %s67, 1
    %p71 = scmp.eq.s32.totalorder %s12, 1
    %p72 = scmp.ne.s32.totalorder %s67, %s69
    %p73 = scmp.eq.s32.totalorder %s12, 0
    %p74 = por %p72, %p73
    %p75 = scmp.ne.s32.totalorder %s67, %s69
    %p76 = scmp.eq.s32.totalorder %s17, 1
    %p77 = por %p75, %p76
    %p78 = scmp.ne.s32.totalorder %s69, %s70
    %p79 = scmp.eq.s32.totalorder %s17, 0
    %p80 = por %p78, %p79
    %p81 = scmp.ne.s32.totalorder %s69, %s70
    %p82 = scmp.eq.s32.totalorder %s18, 1
    %p83 = por %p81, %p82
    %p85 = scmp.ne.s32.totalorder %s70, %s84
    %p86 = scmp.eq.s32.totalorder %s18, 0
    %p87 = por %p85, %p86
    %s89 = sadd.s32 %s88, 1
    %p92 = scmp.eq.s32.totalorder %s12, 1
    %p93 = scmp.ne.s32.totalorder %s88, %s90
    %p94 = scmp.eq.s32.totalorder %s12, 0
    %p95 = por %p93, %p94
    %p96 = scmp.ne.s32.totalorder %s88, %s90
    %p97 = scmp.eq.s32.totalorder %s17, 1
    %p98 = por %p96, %p97
    %p99 = scmp.ne.s32.totalorder %s90, %s91
    %p100 = scmp.eq.s32.totalorder %s17, 0
    %p101 = por %p99, %p100
    %p102 = scmp.ne.s32.totalorder %s90, %s91
    %p103 = scmp.eq.s32.totalorder %s18, 1
    %p104 = por %p102, %p103
    %p106 = scmp.ne.s32.totalorder %s91, %s105
    %p107 = scmp.eq.s32.totalorder %s18, 0
    %p108 = por %p106, %p107
    %s110 = sadd.s32 %s109, 1
    %p113 = scmp.eq.s32.totalorder %s12, 1
    %p114 = scmp.ne.s32.totalorder %s109, %s111
    %p115 = scmp.eq.s32.totalorder %s12, 0
    %p116 = por %p114, %p115
    %p117 = scmp.ne.s32.totalorder %s109, %s111
    %p118 = scmp.eq.s32.totalorder %s17, 1
    %p119 = por %p117, %p118
    %p120 = scmp.ne.s32.totalorder %s111, %s112
    %p121 = scmp.eq.s32.totalorder %s17, 0
    %p122 = por %p120, %p121
    %p123 = scmp.ne.s32.totalorder %s111, %s112
    %p124 = scmp.eq.s32.totalorder %s18, 1
    %p125 = por %p123, %p124
    %p127 = scmp.ne.s32.totalorder %s112, %s126
    %p128 = scmp.eq.s32.totalorder %s18, 0
    %p129 = por %p127, %p128
    %s131 = sadd.s32 %s130, 1
    %p134 = scmp.eq.s32.totalorder %s12, 1
    %p135 = scmp.ne.s32.totalorder %s130, %s132
    %p136 = scmp.eq.s32.totalorder %s12, 0
    %p137 = por %p135, %p136
    %p138 = scmp.ne.s32.totalorder %s130, %s132
    %p139 = scmp.eq.s32.totalorder %s17, 1
    %p140 = por %p138, %p139
    %p141 = scmp.ne.s32.totalorder %s132, %s133
    %p142 = scmp.eq.s32.totalorder %s17, 0
    %p143 = por %p141, %p142
    %p144 = scmp.ne.s32.totalorder %s132, %s133
    %p145 = scmp.eq.s32.totalorder %s18, 1
    %p146 = por %p144, %p145
    %p148 = scmp.ne.s32.totalorder %s133, %s147
    %p149 = scmp.eq.s32.totalorder %s18, 0
    %p150 = por %p148, %p149
    %s151 = ssub.s32 %s12, %s19
    %p152 = scmp.eq.s32.totalorder %s151, 0
    %s154 = sadd.s32 %s153, 1
    %s155 = scalar_select %p152, %s153, %s154
    %p158 = pneg %p152
    %p159 = scmp.eq.s32.totalorder %s12, 1
    %p160 = por %p158, %p159
    %p161 = scmp.ne.s32.totalorder %s153, %s156
    %p162 = scmp.eq.s32.totalorder %s12, 0
    %p163 = por %p161, %p162
    %p164 = scmp.ne.s32.totalorder %s153, %s156
    %p165 = scmp.eq.s32.totalorder %s17, 1
    %p166 = por %p164, %p165
    %p167 = scmp.ne.s32.totalorder %s156, %s157
    %p168 = scmp.eq.s32.totalorder %s17, 0
    %p169 = por %p167, %p168
    %p170 = scmp.ne.s32.totalorder %s156, %s157
    %p171 = scmp.eq.s32.totalorder %s18, 1
    %p172 = por %p170, %p171
    %p174 = scmp.ne.s32.totalorder %s157, %s173
    %p175 = scmp.eq.s32.totalorder %s18, 0
    %p176 = por %p174, %p175
    %p177 = scmp.le.s32.totalorder 1, %s12
    %p178 = scmp.lt.s32.totalorder %s12, 3
    %p179 = pnand %p177, %p178
    %p180 = pneg %p179
    // Predicated region
    $region9: #{separable_repvgg_block.1} parent=5 // pred_check
      _
    $region10: #{separable_repvgg_block.1} parent=5 // pred_check_branch
      %182 = sbr.rel (%p179) target = $region12
    $region11: #{separable_repvgg_block.1} parent=5 // pred_region
      %s183 = ssub.s32 %s12, 1
      // Predicated region
      $region13: #{separable_repvgg_block.1} parent=11 // pred_check
        %p184 = pneg %p59
      $region14: #{separable_repvgg_block.1} parent=11 // pred_check_branch
        %186 = sbr.rel (%p184) target = $region16
      $region15: #{separable_repvgg_block.1} parent=11 // pred_region
        _
      $region16: #{separable_repvgg_block.1} parent=11 // pred_fallthru
        _
      // Predicated region
      $region17: #{separable_repvgg_block.1} parent=11 // pred_check
        %p187 = pneg %p80
      $region18: #{separable_repvgg_block.1} parent=11 // pred_check_branch
        %189 = sbr.rel (%p187) target = $region20
      $region19: #{separable_repvgg_block.1} parent=11 // pred_region
        _
      $region20: #{separable_repvgg_block.1} parent=11 // pred_fallthru
        _
      // Predicated region
      $region21: #{separable_repvgg_block.1} parent=11 // pred_check
        %p190 = pneg %p101
      $region22: #{separable_repvgg_block.1} parent=11 // pred_check_branch
        %192 = sbr.rel (%p190) target = $region24
      $region23: #{separable_repvgg_block.1} parent=11 // pred_region
        _
      $region24: #{separable_repvgg_block.1} parent=11 // pred_fallthru
        _
      // Predicated region
      $region25: #{separable_repvgg_block.1} parent=11 // pred_check
        %p193 = pneg %p122
      $region26: #{separable_repvgg_block.1} parent=11 // pred_check_branch
        %195 = sbr.rel (%p193) target = $region28
      $region27: #{separable_repvgg_block.1} parent=11 // pred_region
        _
      $region28: #{separable_repvgg_block.1} parent=11 // pred_fallthru
        _
      // Predicated region
      $region29: #{separable_repvgg_block.1} parent=11 // pred_check
        %p196 = pneg %p143
      $region30: #{separable_repvgg_block.1} parent=11 // pred_check_branch
        %198 = sbr.rel (%p196) target = $region32
      $region31: #{separable_repvgg_block.1} parent=11 // pred_region
        _
      $region32: #{separable_repvgg_block.1} parent=11 // pred_fallthru
        _
    $region12: #{separable_repvgg_block.1} parent=5 // pred_fallthru
      _
    %p199 = scmp.lt.s32.totalorder %s12, 2
    // Predicated region
    $region33: #{separable_repvgg_block.1} parent=5 // pred_check
      %p200 = pneg %p199
    $region34: #{separable_repvgg_block.1} parent=5 // pred_check_branch
      %202 = sbr.rel (%p200) target = $region36
    $region35: #{separable_repvgg_block.1} parent=5 // pred_region
      // Predicated region
      $region37: #{separable_repvgg_block.1} parent=35 // pred_check
        %p203 = pneg %p32
      $region38: #{separable_repvgg_block.1} parent=35 // pred_check_branch
        %205 = sbr.rel (%p203) target = $region40
      $region39: #{separable_repvgg_block.1} parent=35 // pred_region
        %p206 = scmp.lt.s32.totalorder %s12, 1
        %s207 = scalar_select %p206, %s12, 1
        %s208 = smul.addr %s207, 4
        %s209 = smul.addr %s208, 4
        %s210 = scalar_lea.vmem %s0, %s209
      $region40: #{separable_repvgg_block.1} parent=35 // pred_fallthru
        _
    $region36: #{separable_repvgg_block.1} parent=5 // pred_fallthru
      _
    %p211 = scmp.le.s32.totalorder 1, %s12
    %p212 = scmp.lt.s32.totalorder %s12, 3
    %p213 = pnand %p211, %p212
    %p214 = pneg %p213
    // Predicated region
    $region41: #{separable_repvgg_block.1} parent=5 // pred_check
      _
    $region42: #{separable_repvgg_block.1} parent=5 // pred_check_branch
      %216 = sbr.rel (%p213) target = $region44
    $region43: #{separable_repvgg_block.1} parent=5 // pred_region
      %s217 = ssub.s32 %s12, 1
      %p218 = scmp.lt.s32.totalorder %s17, 1
      %s219 = scalar_select %p218, %s17, 1
      %s220 = smul.addr %s219, 4
      %s221 = smul.addr %s220, 4
      %s222 = scalar_lea.vmem %s0, %s221
      %p223 = pneg %p38
      %p224 = pneg %p35
      %p225 = pneg %p59
      %p226 = pneg %p56
      %p227 = pneg %p80
      %p228 = pneg %p77
      %p229 = pneg %p101
      %p230 = pneg %p98
      %p231 = pneg %p122
      %p232 = pneg %p119
      %p233 = pneg %p143
      %p234 = pneg %p140
      %p235 = pneg %p169
      %p236 = pneg %p166
      %p237 = scmp.lt.s32.totalorder %s17, 1
      %s238 = scalar_select %p237, %s17, 1
      %s239 = smul.addr %s238, 2
      %s240 = smul.addr %s239, 4
      %s241 = scalar_lea.vmem %s6, %s240
      %p242 = scmp.lt.s32.totalorder %s17, 1
      %s243 = scalar_select %p242, %s17, 1
      %s244 = smul.addr %s243, 4
      %s245 = smul.addr %s244, 4
      %s246 = scalar_lea.vmem %s0, %s245
      %p247 = scmp.lt.s32.totalorder %s17, 1
      %s248 = scalar_select %p247, %s17, 1
      %s249 = smul.addr %s248, 2
      %s250 = smul.addr %s249, 4
      %s251 = scalar_lea.vmem %s6, %s250
      %v253 = vld [vmem:[%s3] ss:$2 sm:$0x3]
      %s254 = scalar_lea.vmem %s3, 1
      %v255 = vld [vmem:[%s254] ss:$2 sm:$0x3]
      %v256 = vld [vmem:[%s246] sm:$0xff]
      %v257 = vld [vmem:[%s246 + $0x8] sm:$0xf]
      %v258 = vld [vmem:[%s1] sm:$0xf]
      %260 = vset.pattern.permute.xlu0 0
      %261 = vperm.xlu0 %260, %v258
      %v262 = vpop.permute.xlu0 %261
      %v264 = vunpack.c.l.s4 839922192
      %v265 = vunpack.c.0.s8 %v264
      %v266 = vperm.slane %v262, %v265
      %v268 = vmul.f32 %v256, %v266
      %v269 = vmul.f32 %v257, %v266
      %270 = vset.pattern.permute.xlu0 1
      %271 = vperm.xlu0 %270, %v258
      %v272 = vpop.permute.xlu0 %271
      %v274 = vunpack.c.l.s4 839922192
      %v275 = vunpack.c.0.s8 %v274
      %v276 = vperm.slane %v272, %v275
      %v278 = vmul.f32 %v256, %v276
      %v279 = vmul.f32 %v257, %v276
      %280 = vset.pattern.permute.xlu0 2
      %281 = vperm.xlu0 %280, %v258
      %v282 = vpop.permute.xlu0 %281
      %v284 = vunpack.c.l.s4 839922192
      %v285 = vunpack.c.0.s8 %v284
      %v286 = vperm.slane %v282, %v285
      %v288 = vmul.f32 %v256, %v286
      %v289 = vmul.f32 %v257, %v286
      %290 = vset.pattern.permute.xlu0 3
      %291 = vperm.xlu0 %290, %v258
      %v292 = vpop.permute.xlu0 %291
      %v294 = vunpack.c.l.s4 839922192
      %v295 = vunpack.c.0.s8 %v294
      %v296 = vperm.slane %v292, %v295
      %v298 = vmul.f32 %v256, %v296
      %v299 = vmul.f32 %v257, %v296
      %v300 = vld [vmem:[%s246 + $0x4] sm:$0xff]
      %301 = vset.pattern.permute.xlu0 4
      %302 = vperm.xlu0 %301, %v258
      %v303 = vpop.permute.xlu0 %302
      %v305 = vunpack.c.l.s4 839922192
      %v306 = vunpack.c.0.s8 %v305
      %v307 = vperm.slane %v303, %v306
      %v309 = vmul.f32 %v300, %v307
      %v310 = vld [vmem:[%s246 + $0x4] sm:$0xff]
      %v311 = vld [vmem:[%s246 + $0xc] sm:$0xf]
      %312 = vset.pattern.permute.xlu0 5
      %313 = vperm.xlu0 %312, %v258
      %v314 = vpop.permute.xlu0 %313
      %v316 = vunpack.c.l.s4 839922192
      %v317 = vunpack.c.0.s8 %v316
      %v318 = vperm.slane %v314, %v317
      %v320 = vmul.f32 %v310, %v318
      %v321 = vmul.f32 %v311, %v318
      %324 = vrot.lane.b32.xlu0 %v298, 112
      %v325 = vpop.permute.xlu0 %324
      %326 = vrot.lane.b32.xlu0 %v299, 112
      %v327 = vpop.permute.xlu0 %326
      %v328 = vrot.slane %v325, 4
      %v329 = vrot.slane %v327, 4
      %vm330 = vcmask 1043456
      %v331 = vsel %vm330, %v328, %v329
      %vm332 = vcmask 916480
      %v333 = vsel %vm332, %v325, %v331
      %v336 = vadd.f32 %v268, %v333
      %v337 = vadd.f32 %v269, %v327
      %339 = vrot.lane.b32.xlu0 %v309, 112
      %v340 = vpop.permute.xlu0 %339
      %v341 = vrot.slane %v340, 4
      %v342 = vsel %vm332, %v341, %v340
      %v345 = vadd.f32 %v278, %v342
      %v346 = vadd.f32 %v279, %v341
      %349 = vrot.lane.b32.xlu0 %v320, 112
      %v350 = vpop.permute.xlu0 %349
      %351 = vrot.lane.b32.xlu0 %v321, 112
      %v352 = vpop.permute.xlu0 %351
      %v353 = vrot.slane %v350, 4
      %v354 = vsel %vm332, %v353, %v350
      %v355 = vsel %vm332, %v353, %v352
      %v358 = vadd.f32 %v288, %v354
      %v359 = vadd.f32 %v289, %v355
      %360 = vset.pattern.permute.xlu0 6
      %361 = vperm.xlu0 %360, %v258
      %v362 = vpop.permute.xlu0 %361
      %v364 = vunpack.c.l.s4 839922192
      %v365 = vunpack.c.0.s8 %v364
      %v366 = vperm.slane %v362, %v365
      %v368 = vmul.f32 %v310, %v366
      %v369 = vmul.f32 %v311, %v366
      %370 = vset.pattern.permute.xlu0 7
      %371 = vperm.xlu0 %370, %v258
      %v372 = vpop.permute.xlu0 %371
      %v374 = vunpack.c.l.s4 839922192
      %v375 = vunpack.c.0.s8 %v374
      %v376 = vperm.slane %v372, %v375
      %v378 = vmul.f32 %v310, %v376
      %v379 = vmul.f32 %v311, %v376
      %380 = vset.pattern.permute.xlu0 8
      %381 = vperm.xlu0 %380, %v258
      %v382 = vpop.permute.xlu0 %381
      %v384 = vunpack.c.l.s4 839922192
      %v385 = vunpack.c.0.s8 %v384
      %v386 = vperm.slane %v382, %v385
      %v388 = vmul.f32 %v310, %v386
      %v389 = vmul.f32 %v311, %v386
      %392 = vrot.lane.b32.xlu0 %v368, 96
      %v393 = vpop.permute.xlu0 %392
      %394 = vrot.lane.b32.xlu0 %v369, 96
      %v395 = vpop.permute.xlu0 %394
      %v396 = vrot.slane %v393, 4
      %vm397 = vcmask 785408
      %v398 = vsel %vm397, %v396, %v393
      %v399 = vsel %vm397, %v396, %v395
      %v402 = vadd.f32 %v336, %v398
      %v403 = vadd.f32 %v337, %v399
      %406 = vrot.lane.b32.xlu0 %v378, 96
      %v407 = vpop.permute.xlu0 %406
      %408 = vrot.lane.b32.xlu0 %v379, 96
      %v409 = vpop.permute.xlu0 %408
      %v410 = vrot.slane %v407, 4
      %v411 = vsel %vm397, %v410, %v407
      %v412 = vsel %vm397, %v410, %v409
      %v415 = vadd.f32 %v345, %v411
      %v416 = vadd.f32 %v346, %v412
      %419 = vrot.lane.b32.xlu0 %v388, 96
      %v420 = vpop.permute.xlu0 %419
      %421 = vrot.lane.b32.xlu0 %v389, 96
      %v422 = vpop.permute.xlu0 %421
      %v423 = vrot.slane %v420, 4
      %v424 = vsel %vm397, %v423, %v420
      %v425 = vsel %vm397, %v423, %v422
      %v428 = vadd.f32 %v358, %v424
      %v429 = vadd.f32 %v359, %v425
      %v431 = vperm.slane %v253, 0
      %v432 = vperm.slane %v253, 1
      %437 = vst [vmem:[#allocation1] ss:$2 sm:$0xff] %v402
      %s438 = scalar_lea.vmem [#allocation1], 16
      %439 = vst [vmem:[%s438] ss:$2 sm:$0xff] %v403
      %v440 = vld.sshfl [vmem:[#allocation1] sm:$0xff pattern:$0x75316420]
      %v441 = vld.sshfl [vmem:[#allocation1 + $0x8] sm:$0xff pattern:$0x75316420]
      %v442 = vld.sshfl [vmem:[#allocation1 + $0x10] sm:$0xff pattern:$0x75316420]
      %443 = vrot.lane.b32.xlu0 %v440, 17
      %v444 = vpop.permute.xlu0 %443
      %445 = vrot.lane.b32.xlu0 %v441, 17
      %v446 = vpop.permute.xlu0 %445
      %447 = vrot.lane.b32.xlu0 %v442, 17
      %v448 = vpop.permute.xlu0 %447
      %vm449 = vcmask 138240
      %v450 = vsel %vm449, %v444, %v446
      %v451 = vsel %vm449, %v446, %v448
      %v454 = vmul.f32 %v431, %v450
      %v455 = vmul.f32 %v432, %v451
      %v458 = vrot.slane %v455, 4
      %v459 = vsel %vm330, %v454, %v458
      %460 = vrot.lane.b32.xlu0 %v459, 112
      %v461 = vpop.permute.xlu0 %460
      %v462 = vrot.slane %v461, 4
      %v463 = vsel %vm332, %v462, %v461
      %v466 = vadd.f32 %v415, %v463
      %v467 = vadd.f32 %v416, %v462
      %v469 = vperm.slane %v255, 0
      %v470 = vperm.slane %v255, 1
      %475 = vst [vmem:[#allocation1] ss:$2 sm:$0xff] %v428
      %s476 = scalar_lea.vmem [#allocation1], 16
      %477 = vst [vmem:[%s476] ss:$2 sm:$0xff] %v429
      %v478 = vld.sshfl [vmem:[#allocation1] sm:$0xff pattern:$0x75316420]
      %v479 = vld.sshfl [vmem:[#allocation1 + $0x8] sm:$0xff pattern:$0x75316420]
      %v480 = vld.sshfl [vmem:[#allocation1 + $0x10] sm:$0xff pattern:$0x75316420]
      %481 = vrot.lane.b32.xlu0 %v478, 15
      %v482 = vpop.permute.xlu0 %481
      %483 = vrot.lane.b32.xlu0 %v479, 15
      %v484 = vpop.permute.xlu0 %483
      %485 = vrot.lane.b32.xlu0 %v480, 15
      %v486 = vpop.permute.xlu0 %485
      %vm487 = vcmask 121856
      %v488 = vsel %vm487, %v482, %v484
      %v489 = vsel %vm487, %v484, %v486
      %v492 = vmul.f32 %v469, %v488
      %v493 = vmul.f32 %v470, %v489
      %v496 = vrot.slane %v493, 4
      %v497 = vsel %vm330, %v492, %v496
      %498 = vrot.lane.b32.xlu0 %v497, 112
      %v499 = vpop.permute.xlu0 %498
      %v500 = vrot.slane %v499, 4
      %v501 = vsel %vm332, %v500, %v499
      %v504 = vadd.f32 %v466, %v501
      %v505 = vadd.f32 %v467, %v500
      %v506 = vld [vmem:[%s2] sm:$0xf]
      %508 = vset.pattern.permute.xlu0 0
      %509 = vperm.xlu0 %508, %v506
      %v510 = vpop.permute.xlu0 %509
      %v512 = vunpack.c.l.s4 839922192
      %v513 = vunpack.c.0.s8 %v512
      %v514 = vperm.slane %v510, %v513
      %v516 = vadd.f32 %v504, %v514
      %v517 = vadd.f32 %v505, %v514
      %v518 = vmax.f32 %v516, 0.0
      %v519 = vmax.f32 %v517, 0.0
      %v520 = vld [vmem:[%s4] sm:$0x3]
      %523 = vst [vmem:[#allocation1] ss:$2 sm:$0xff] %v518
      %s524 = scalar_lea.vmem [#allocation1], 16
      %525 = vst [vmem:[%s524] ss:$2 sm:$0xff] %v519
      %v526 = vld.sshfl [vmem:[#allocation1] sm:$0xff pattern:$0x75316420]
      %v527 = vld.sshfl [vmem:[#allocation1 + $0x8] sm:$0xff pattern:$0x75316420]
      %v528 = vld.sshfl [vmem:[#allocation1 + $0x10] sm:$0xff pattern:$0x75316420]
      %v532 = vpack.c.bf16 %v526, %v526
      %v533 = vpack.c.bf16 %v527, %v527
      %v534 = vpack.c.bf16 %v528, %v528
      %v535 = vld [vmem:[%s5] sm:$0xf]
      %537 = vset.pattern.permute.xlu0 0
      %538 = vperm.xlu0 %537, %v535
      %v539 = vpop.permute.xlu0 %538
      %544 = vrot.lane.b32.xlu0 %v532, 16
      %v545 = vpop.permute.xlu0 %544
      %546 = vrot.lane.b32.xlu0 %v533, 16
      %v547 = vpop.permute.xlu0 %546
      %548 = vrot.lane.b32.xlu0 %v534, 16
      %v549 = vpop.permute.xlu0 %548
      %vm550 = vcmask 130048
      %v551 = vsel %vm550, %v545, %v547
      %v552 = vsel %vm550, %v547, %v549
      %vm553 = vcmask 31744
      %v555 = vsel %vm553, %v520, 0
      %vm557 = vcmask 1041408
      %v559 = vsel %vm557, %v551, 0
      %v562 = vsel %vm557, %v552, 0
      %564 = vmatpush.bf16.msra.mxu0 0
      %565 = vmatpush.bf16.msra.mxu0 0
      %566 = vmatpush.bf16.msra.mxu0 0
      %567 = vmatpush.bf16.msra.mxu0 0
      %568 = vmatpush.bf16.msra.mxu0 0
      %569 = vmatpush.bf16.msra.mxu0 0
      %570 = vmatpush.bf16.msra.mxu0 0
      %571 = vmatpush.bf16.msra.mxu0 %v559
      %572 = vmatmul.bf16.gmra.mxu0 %v555
      %v573 = vpop.f32.mrf.mxu0
      %v574 = vadd.f32 %v539, %v573
      %v575 = vpop.f32.mrf.mxu0
      %576 = vdwg.mxu0
      %577 = vmatpush.bf16.msra.mxu0 0
      %578 = vmatpush.bf16.msra.mxu0 0
      %579 = vmatpush.bf16.msra.mxu0 0
      %580 = vmatpush.bf16.msra.mxu0 0
      %581 = vmatpush.bf16.msra.mxu0 0
      %582 = vmatpush.bf16.msra.mxu0 0
      %583 = vmatpush.bf16.msra.mxu0 0
      %584 = vmatpush.bf16.msra.mxu0 %v562
      %585 = vmatmul.bf16.gmra.mxu0 %v555
      %v586 = vpop.f32.mrf.mxu0
      %v587 = vadd.f32 %v539, %v586
      %v588 = vpop.f32.mrf.mxu0
      %589 = vdwg.mxu0
      %v590 = vmax.f32 %v574, 0.0
      %v591 = vmax.f32 %v587, 0.0
      %v594 = vrot.slane %v591, 4
      %v595 = vsel %vm330, %v590, %v594
      %597 = vst [vmem:[%s251] sm:$0xff] %v595
      %p598 = scmp.lt.s32.totalorder %s17, 1
      %s599 = scalar_select %p598, %s17, 1
      %s600 = smul.addr %s599, 2
      %s601 = smul.addr %s600, 4
      %s602 = scalar_lea.vmem %s6, %s601
      // Predicated region
      $region45: #{separable_repvgg_block.1} parent=43 // pred_check
        %p603 = pneg %p166
      $region46: #{separable_repvgg_block.1} parent=43 // pred_check_branch
        %605 = sbr.rel (%p603) target = $region48
      $region47: #{separable_repvgg_block.1} parent=43 // pred_region
        _
      $region48: #{separable_repvgg_block.1} parent=43 // pred_fallthru
        _
    $region44: #{separable_repvgg_block.1} parent=5 // pred_fallthru
      _
    %p606 = scmp.le.s32.totalorder 2, %s12
    // Predicated region
    $region49: #{separable_repvgg_block.1} parent=5 // pred_check
      %p607 = pneg %p606
    $region50: #{separable_repvgg_block.1} parent=5 // pred_check_branch
      %609 = sbr.rel (%p607) target = $region52
    $region51: #{separable_repvgg_block.1} parent=5 // pred_region
      %s610 = ssub.s32 %s12, 2
      // Predicated region
      $region53: #{separable_repvgg_block.1} parent=51 // pred_check
        %p611 = pneg %p172
      $region54: #{separable_repvgg_block.1} parent=51 // pred_check_branch
        %613 = sbr.rel (%p611) target = $region56
      $region55: #{separable_repvgg_block.1} parent=51 // pred_region
        %p614 = scmp.lt.s32.totalorder %s18, 1
        %s615 = scalar_select %p614, %s18, 1
        %s616 = smul.addr %s615, 2
        %s617 = smul.addr %s616, 4
        %s618 = scalar_lea.vmem %s6, %s617
      $region56: #{separable_repvgg_block.1} parent=51 // pred_fallthru
        _
    $region52: #{separable_repvgg_block.1} parent=5 // pred_fallthru
      _
  $region6: #{separable_repvgg_block.1} parent=0 // loop_footer
    %s16 = sadd.s32 1, %s12
  $region7: #{separable_repvgg_block.1} parent=0 // loop_footer_branch
    %11 = sbr.rel target = $region3
  $region8: #{separable_repvgg_block.1} parent=0 // loop_exit
    _

</llo_original>
